<compile_context>
chip_gen: v7x
topology: tpu7x:2x2x1
jax: 0.10.0
libtpu: 0.0.40
codegen_flags: <defaults>
</compile_context>

<pallas_src>
import functools

import jax
import jax.numpy as jnp
from jax.experimental import pallas as pl
from jax.experimental.pallas import tpu as pltpu


def _conv1x1_mxu_kernel(x_ref, w_ref, b_ref, o_ref):
    # x_ref: (C_in, S_TILE)  w_ref: (C_out, C_in)  b_ref: (C_out, 1)
    # o_ref: (C_out, S_TILE)
    acc = jnp.dot(w_ref[...], x_ref[...], preferred_element_type=jnp.float32)
    o_ref[...] = (acc + b_ref[...].astype(jnp.float32)).astype(o_ref.dtype)


def _conv1x1_vpu_kernel(x_ref, w_ref, b_ref, o_ref):
    # VPU broadcast-MAC path for tiny channel counts: with K = C_in of only a
    # few, the MXU would use a handful of its rows and pay the drain path; a
    # few broadcast FMAs per lane are cheaper (the kernel is HBM-bound either
    # way, this just keeps the vector-extended slot free).
    x = x_ref[...].astype(jnp.float32)            # (C_in, S_TILE)
    w = w_ref[...].astype(jnp.float32)            # (C_out, C_in)
    c_in = x.shape[0]
    acc = jnp.broadcast_to(b_ref[...].astype(jnp.float32),
                           (w.shape[0], x.shape[1]))
    for ci in range(c_in):                        # static unroll, C_in is tiny
        acc = acc + w[:, ci:ci + 1] * x[ci:ci + 1, :]
    o_ref[...] = acc.astype(o_ref.dtype)


def _pick_s_tile(s, c_in, c_out, itemsize, target_bytes=4 << 20):
    """Largest lane-aligned spatial tile keeping (x_tile + out_tile) near
    `target_bytes`; double-buffered that is ~2x, well under the scoped-VMEM
    default on every TPU generation (incl. v7x)."""
    if s % 128 != 0:
        # Block last dim must be a multiple of 128 or equal the full dim.
        # TODO(synk): pad S to a lane multiple for very large, misaligned S.
        return s
    per_lane = (c_in + c_out) * itemsize
    tile = max(128, (target_bytes // per_lane) // 128 * 128)
    return min(s, tile)


@functools.partial(jax.jit, static_argnames=("s_tile", "compute_dtype"))
def conv3d_1x1(x_ncdhw, weight, bias, *, s_tile=None, compute_dtype=None):
    """Pointwise 3D conv: x (N, C_in, D, H, W), weight (C_out, C_in, 1, 1, 1),
    bias (C_out,).  Returns (N, C_out, D, H, W)."""
    n, c_in, d, h, w = x_ncdhw.shape
    c_out = weight.shape[0]
    s = d * h * w

    # Free reshapes only -- no transposes, no extra HBM round-trips.
    x3 = x_ncdhw.reshape(n, c_in, s)              # (N, C_in, S)
    w2 = weight.reshape(c_out, c_in)              # (C_out, C_in)
    b2 = bias.reshape(c_out, 1)                   # (C_out, 1)

    out_dtype = x_ncdhw.dtype
    if compute_dtype is not None:
        # Optional bf16 path for v6e/v7x (halves HBM bytes for x); accumulation
        # stays f32 inside the kernel.  Off by default to keep f32 parity.
        x3 = x3.astype(compute_dtype)
        w2 = w2.astype(compute_dtype)

    if s_tile is None:
        s_tile = _pick_s_tile(s, c_in, c_out, jnp.dtype(x3.dtype).itemsize)

    grid = (n, pl.cdiv(s, s_tile))
    kernel = _conv1x1_vpu_kernel if c_in <= 8 else _conv1x1_mxu_kernel

    cost = pl.CostEstimate(
        flops=2 * n * s * c_in * c_out,
        transcendentals=0,
        bytes_accessed=(x3.size * x3.dtype.itemsize
                        + w2.size * w2.dtype.itemsize
                        + b2.size * b2.dtype.itemsize
                        + n * c_out * s * jnp.dtype(out_dtype).itemsize),
    )

    out3 = pl.pallas_call(
        kernel,
        out_shape=jax.ShapeDtypeStruct((n, c_out, s), out_dtype),
        grid_spec=pltpu.PrefetchScalarGridSpec(
            num_scalar_prefetch=0,
            grid=grid,
            in_specs=[
                # x tile: (C_in, S_TILE), lane-dense on the spatial axis.
                pl.BlockSpec((None, c_in, s_tile), lambda ni, si: (ni, 0, si)),
                # Full weight / bias, resident across the grid.
                pl.BlockSpec((c_out, c_in), lambda ni, si: (0, 0)),
                pl.BlockSpec((c_out, 1), lambda ni, si: (0, 0)),
            ],
            out_specs=pl.BlockSpec((None, c_out, s_tile),
                                   lambda ni, si: (ni, 0, si)),
        ),
        compiler_params=pltpu.CompilerParams(
            dimension_semantics=("parallel", "parallel"),
            vmem_limit_bytes=32 * 1024 * 1024,
        ),
        cost_estimate=cost,
    )(x3, w2, b2)

    return out3.reshape(n, c_out, d, h, w)


if __name__ == "__main__":
    # Small shapes consistent with Conv3d(in_channels, out_channels, kernel_size=1).
    N, C_IN, C_OUT, D, H, W = 2, 4, 8, 8, 8, 8

    key = jax.random.PRNGKey(0)
    kx, kw, kb = jax.random.split(key, 3)

    x = jax.random.normal(kx, (N, C_IN, D, H, W), dtype=jnp.float32)

    # Deterministic parameter init (matches PyTorch Conv3d default fan-in bound).
    fan_in = C_IN * 1 * 1 * 1
    bound = 1.0 / (fan_in ** 0.5)
    weight = jax.random.uniform(kw, (C_OUT, C_IN, 1, 1, 1), jnp.float32, -bound, bound)
    bias = jax.random.uniform(kb, (C_OUT,), jnp.float32, -bound, bound)

    out = conv3d_1x1(x, weight, bias)
    out = jax.block_until_ready(out)

    # Reference: pointwise conv == channel einsum + bias.
    ref = jnp.einsum("ncdhw,oc->nodhw", x, weight.reshape(C_OUT, C_IN)) + bias.reshape(
        1, C_OUT, 1, 1, 1
    )
    assert out.shape == (N, C_OUT, D, H, W)
    assert jnp.allclose(out, ref, atol=1e-5, rtol=1e-5)

    print("KERNEL_OK")
</pallas_src>

<mosaic_0001>
module attributes {stable_mosaic.version = 11 : i64} {
  func.func @_conv1x1_vpu_kernel(%arg0: i32, %arg1: i32, %arg2: memref<1x4x512xf32, #tpu.memory_space<vmem>>, %arg3: memref<8x4xf32, #tpu.memory_space<vmem>>, %arg4: memref<8x1xf32, #tpu.memory_space<vmem>>, %arg5: memref<1x8x512xf32, #tpu.memory_space<vmem>>) attributes {dimension_semantics = [#tpu.dimension_semantics<parallel>, #tpu.dimension_semantics<parallel>], iteration_bounds = array<i64: 2, 1>, scalar_prefetch = 0 : i64, scratch_operands = 0 : i64, tpu.core_type = #tpu.core_type<tc>, window_params = [{transform_indices = @transform_0, window_bounds = array<i64: 1, 4, 512>}, {pipeline_mode = #tpu.pipeline_mode<synchronous>, transform_indices = @transform_1, window_bounds = array<i64: 8, 4>}, {pipeline_mode = #tpu.pipeline_mode<synchronous>, transform_indices = @transform_2, window_bounds = array<i64: 8, 1>}, {transform_indices = @transform_3, window_bounds = array<i64: 1, 8, 512>}]} {
    %c0 = arith.constant 0 : index
    %c0_0 = arith.constant 0 : index
    %c0_1 = arith.constant 0 : index
    %0 = vector.load %arg2[%c0, %c0_0, %c0_1] : memref<1x4x512xf32, #tpu.memory_space<vmem>>, vector<1x4x512xf32>
    %1 = vector.shape_cast %0 : vector<1x4x512xf32> to vector<4x512xf32>
    %c0_2 = arith.constant 0 : index
    %c0_3 = arith.constant 0 : index
    %2 = vector.load %arg3[%c0_2, %c0_3] : memref<8x4xf32, #tpu.memory_space<vmem>>, vector<8x4xf32>
    %c0_4 = arith.constant 0 : index
    %c0_5 = arith.constant 0 : index
    %3 = vector.load %arg4[%c0_4, %c0_5] : memref<8x1xf32, #tpu.memory_space<vmem>>, vector<8x1xf32>
    %4 = vector.shape_cast %3 : vector<8x1xf32> to vector<8x1xf32>
    %5 = vector.broadcast %4 : vector<8x1xf32> to vector<8x512xf32>
    %6 = vector.extract_strided_slice %2 {offsets = [0, 0], sizes = [8, 1], strides = [1, 1]} : vector<8x4xf32> to vector<8x1xf32>
    %7 = vector.extract_strided_slice %1 {offsets = [0, 0], sizes = [1, 512], strides = [1, 1]} : vector<4x512xf32> to vector<1x512xf32>
    %8 = vector.broadcast %6 : vector<8x1xf32> to vector<8x512xf32>
    %9 = vector.broadcast %7 : vector<1x512xf32> to vector<8x512xf32>
    %10 = arith.mulf %8, %9 : vector<8x512xf32>
    %11 = arith.addf %5, %10 : vector<8x512xf32>
    %12 = vector.extract_strided_slice %2 {offsets = [0, 1], sizes = [8, 1], strides = [1, 1]} : vector<8x4xf32> to vector<8x1xf32>
    %13 = vector.extract_strided_slice %1 {offsets = [1, 0], sizes = [1, 512], strides = [1, 1]} : vector<4x512xf32> to vector<1x512xf32>
    %14 = vector.broadcast %12 : vector<8x1xf32> to vector<8x512xf32>
    %15 = vector.broadcast %13 : vector<1x512xf32> to vector<8x512xf32>
    %16 = arith.mulf %14, %15 : vector<8x512xf32>
    %17 = arith.addf %11, %16 : vector<8x512xf32>
    %18 = vector.extract_strided_slice %2 {offsets = [0, 2], sizes = [8, 1], strides = [1, 1]} : vector<8x4xf32> to vector<8x1xf32>
    %19 = vector.extract_strided_slice %1 {offsets = [2, 0], sizes = [1, 512], strides = [1, 1]} : vector<4x512xf32> to vector<1x512xf32>
    %20 = vector.broadcast %18 : vector<8x1xf32> to vector<8x512xf32>
    %21 = vector.broadcast %19 : vector<1x512xf32> to vector<8x512xf32>
    %22 = arith.mulf %20, %21 : vector<8x512xf32>
    %23 = arith.addf %17, %22 : vector<8x512xf32>
    %24 = vector.extract_strided_slice %2 {offsets = [0, 3], sizes = [8, 1], strides = [1, 1]} : vector<8x4xf32> to vector<8x1xf32>
    %25 = vector.extract_strided_slice %1 {offsets = [3, 0], sizes = [1, 512], strides = [1, 1]} : vector<4x512xf32> to vector<1x512xf32>
    %26 = vector.broadcast %24 : vector<8x1xf32> to vector<8x512xf32>
    %27 = vector.broadcast %25 : vector<1x512xf32> to vector<8x512xf32>
    %28 = arith.mulf %26, %27 : vector<8x512xf32>
    %29 = arith.addf %23, %28 : vector<8x512xf32>
    %c0_6 = arith.constant 0 : index
    %c0_7 = arith.constant 0 : index
    %c0_8 = arith.constant 0 : index
    %30 = vector.load %arg5[%c0_6, %c0_7, %c0_8] : memref<1x8x512xf32, #tpu.memory_space<vmem>>, vector<1x8x512xf32>
    %31 = vector.shape_cast %30 : vector<1x8x512xf32> to vector<8x512xf32>
    %32 = vector.shape_cast %29 : vector<8x512xf32> to vector<1x8x512xf32>
    tpu.vector_store %arg5[%c0_6, %c0_7, %c0_8], %32 {strides = array<i32>} : memref<1x8x512xf32, #tpu.memory_space<vmem>>, vector<1x8x512xf32>,
    return
  }
  func.func @transform_0(%arg0: i32, %arg1: i32) -> (i32, i32, i32) {
    %c0_i32 = arith.constant 0 : i32
    %c0_i32_0 = arith.constant 0 : i32
    return %arg0, %c0_i32, %arg1 : i32, i32, i32
  }
  func.func @transform_1(%arg0: i32, %arg1: i32) -> (i32, i32) {
    %c0_i32 = arith.constant 0 : i32
    %c0_i32_0 = arith.constant 0 : i32
    %c0_i32_1 = arith.constant 0 : i32
    return %c0_i32, %c0_i32_0 : i32, i32
  }
  func.func @transform_2(%arg0: i32, %arg1: i32) -> (i32, i32) {
    %c0_i32 = arith.constant 0 : i32
    %c0_i32_0 = arith.constant 0 : i32
    %c0_i32_1 = arith.constant 0 : i32
    return %c0_i32, %c0_i32_0 : i32, i32
  }
  func.func @transform_3(%arg0: i32, %arg1: i32) -> (i32, i32, i32) {
    %c0_i32 = arith.constant 0 : i32
    %c0_i32_0 = arith.constant 0 : i32
    return %arg0, %c0_i32, %arg1 : i32, i32, i32
  }
}

</mosaic_0001>

<llo_original>
// kernel: conv3d_1x1.1
$region0: #{conv3d_1x1.1}
  #allocation0 [shape = 'u32[]', space=smem, size = 0x4, offset = 0x4, fixed_abs, tag = 'smem constant byte address 0x4 - core index']
  #allocation1 [shape = 'u32[144,128]{1,0:T(1,128)}', space=vmem, size = 0x12000, scoped, tag = 'internal scratch']
  %s0 = inlined_call_operand.vmem [shape: f32[2,4,512], index: 0, kind: input, shape index: {}]
  %s1 = inlined_call_operand.vmem [shape: f32[8,4], index: 1, kind: input, shape index: {}]
  %s2 = inlined_call_operand.vmem [shape: f32[8,1], index: 2, kind: input, shape index: {}]
  %s3 = inlined_call_operand.vmem [shape: f32[2,8,512], index: 3, kind: output, shape index: {}]
  %s4 = sld [smem:[#allocation0]]
  $region45: #{conv3d_1x1.1} parent=0
    _
  %s6 = ssub.s32 1, %s4
  %s7 = scalar_select 0, %s6, %s4
  loop: start=0, step=1, limit=4
  $region2: #{conv3d_1x1.1} parent=0 // loop_pre_header
    _
  $region3: #{conv3d_1x1.1} parent=0 // loop_header
    %s9 = sphi 0, %s13
    %p10 = scmp.ge.s32.totalorder %s9, 4
    %s16 = sphi 0, %s28
    %s17 = sphi 0, %s24
    %s18 = sphi 0, %s16
    %s19 = sphi 0, %s17
    %s20 = sphi 0, %s18
    %s21 = sphi 0, %s19
    %s33 = sphi 0, %s35
    %s36 = sphi 0, %s33
    %s37 = sphi 0, %s36
    %s53 = sphi 0, %s37
    %s57 = sphi 0, %s57
    %s59 = sphi 0, %s57
    %s60 = sphi 0, %s59
    %s74 = sphi 0, %s60
    %s78 = sphi 0, %s78
    %s80 = sphi 0, %s78
    %s81 = sphi 0, %s80
    %s95 = sphi 0, %s81
    %s103 = sphi 0, %s105
    %s106 = sphi 0, %s103
    %s107 = sphi 0, %s106
    %s123 = sphi 0, %s107
  $region4: #{conv3d_1x1.1} parent=0 // loop_header_branch
    %12 = sbr.rel (%p10) target = $region8
  $region5: #{conv3d_1x1.1} parent=0 // loop_body
    %s14 = ssub.s32 %s9, 1
    %s15 = ssub.s32 %s9, 2
    %s22 = sadd.s32 1, %s17
    %p23 = scmp.ge.s32.totalorder %s22, 1
    %s24 = scalar_select %p23, 0, %s22
    %s25 = sadd.s32 1, %s16
    %s26 = scalar_select %p23, %s25, %s16
    %p27 = scmp.ge.s32.totalorder %s26, 2
    %s28 = scalar_select %p27, 0, %s26
    %s29 = ssub.s32 %s16, %s28
    %s30 = ssub.s32 %s17, %s24
    %s31 = sor.u32 %s29, %s30
    %p32 = scmp.eq.s32.totalorder %s31, 0
    %s34 = sadd.s32 %s33, 1
    %s35 = scalar_select %p32, %s33, %s34
    %p38 = pneg %p32
    %p39 = scmp.eq.s32.totalorder %s9, 1
    %p40 = por %p38, %p39
    %p41 = scmp.ne.s32.totalorder %s33, %s36
    %p42 = scmp.eq.s32.totalorder %s9, 0
    %p43 = por %p41, %p42
    %p44 = scmp.ne.s32.totalorder %s33, %s36
    %p45 = scmp.eq.s32.totalorder %s14, 1
    %p46 = por %p44, %p45
    %p47 = scmp.ne.s32.totalorder %s36, %s37
    %p48 = scmp.eq.s32.totalorder %s14, 0
    %p49 = por %p47, %p48
    %p50 = scmp.ne.s32.totalorder %s36, %s37
    %p51 = scmp.eq.s32.totalorder %s15, 1
    %p52 = por %p50, %p51
    %p54 = scmp.ne.s32.totalorder %s37, %s53
    %p55 = scmp.eq.s32.totalorder %s15, 0
    %p56 = por %p54, %p55
    %s58 = sadd.s32 %s57, 1
    %p61 = scmp.eq.s32.totalorder %s9, 1
    %p62 = scmp.ne.s32.totalorder %s57, %s59
    %p63 = scmp.eq.s32.totalorder %s9, 0
    %p64 = por %p62, %p63
    %p65 = scmp.ne.s32.totalorder %s57, %s59
    %p66 = scmp.eq.s32.totalorder %s14, 1
    %p67 = por %p65, %p66
    %p68 = scmp.ne.s32.totalorder %s59, %s60
    %p69 = scmp.eq.s32.totalorder %s14, 0
    %p70 = por %p68, %p69
    %p71 = scmp.ne.s32.totalorder %s59, %s60
    %p72 = scmp.eq.s32.totalorder %s15, 1
    %p73 = por %p71, %p72
    %p75 = scmp.ne.s32.totalorder %s60, %s74
    %p76 = scmp.eq.s32.totalorder %s15, 0
    %p77 = por %p75, %p76
    %s79 = sadd.s32 %s78, 1
    %p82 = scmp.eq.s32.totalorder %s9, 1
    %p83 = scmp.ne.s32.totalorder %s78, %s80
    %p84 = scmp.eq.s32.totalorder %s9, 0
    %p85 = por %p83, %p84
    %p86 = scmp.ne.s32.totalorder %s78, %s80
    %p87 = scmp.eq.s32.totalorder %s14, 1
    %p88 = por %p86, %p87
    %p89 = scmp.ne.s32.totalorder %s80, %s81
    %p90 = scmp.eq.s32.totalorder %s14, 0
    %p91 = por %p89, %p90
    %p92 = scmp.ne.s32.totalorder %s80, %s81
    %p93 = scmp.eq.s32.totalorder %s15, 1
    %p94 = por %p92, %p93
    %p96 = scmp.ne.s32.totalorder %s81, %s95
    %p97 = scmp.eq.s32.totalorder %s15, 0
    %p98 = por %p96, %p97
    %s99 = ssub.s32 %s16, %s28
    %s100 = ssub.s32 %s17, %s24
    %s101 = sor.u32 %s99, %s100
    %p102 = scmp.eq.s32.totalorder %s101, 0
    %s104 = sadd.s32 %s103, 1
    %s105 = scalar_select %p102, %s103, %s104
    %p108 = pneg %p102
    %p109 = scmp.eq.s32.totalorder %s9, 1
    %p110 = por %p108, %p109
    %p111 = scmp.ne.s32.totalorder %s103, %s106
    %p112 = scmp.eq.s32.totalorder %s9, 0
    %p113 = por %p111, %p112
    %p114 = scmp.ne.s32.totalorder %s103, %s106
    %p115 = scmp.eq.s32.totalorder %s14, 1
    %p116 = por %p114, %p115
    %p117 = scmp.ne.s32.totalorder %s106, %s107
    %p118 = scmp.eq.s32.totalorder %s14, 0
    %p119 = por %p117, %p118
    %p120 = scmp.ne.s32.totalorder %s106, %s107
    %p121 = scmp.eq.s32.totalorder %s15, 1
    %p122 = por %p120, %p121
    %p124 = scmp.ne.s32.totalorder %s107, %s123
    %p125 = scmp.eq.s32.totalorder %s15, 0
    %p126 = por %p124, %p125
    %p127 = scmp.le.s32.totalorder 1, %s9
    %p128 = scmp.lt.s32.totalorder %s9, 3
    %p129 = pnand %p127, %p128
    %p130 = pneg %p129
    // Predicated region
    $region9: #{conv3d_1x1.1} parent=5 // pred_check
      _
    $region10: #{conv3d_1x1.1} parent=5 // pred_check_branch
      %132 = sbr.rel (%p129) target = $region12
    $region11: #{conv3d_1x1.1} parent=5 // pred_region
      %s133 = ssub.s32 %s9, 1
      // Predicated region
      $region13: #{conv3d_1x1.1} parent=11 // pred_check
        %p134 = pneg %p70
      $region14: #{conv3d_1x1.1} parent=11 // pred_check_branch
        %136 = sbr.rel (%p134) target = $region16
      $region15: #{conv3d_1x1.1} parent=11 // pred_region
        _
      $region16: #{conv3d_1x1.1} parent=11 // pred_fallthru
        _
      // Predicated region
      $region17: #{conv3d_1x1.1} parent=11 // pred_check
        %p137 = pneg %p91
      $region18: #{conv3d_1x1.1} parent=11 // pred_check_branch
        %139 = sbr.rel (%p137) target = $region20
      $region19: #{conv3d_1x1.1} parent=11 // pred_region
        _
      $region20: #{conv3d_1x1.1} parent=11 // pred_fallthru
        _
    $region12: #{conv3d_1x1.1} parent=5 // pred_fallthru
      _
    %p140 = scmp.lt.s32.totalorder %s9, 2
    // Predicated region
    $region21: #{conv3d_1x1.1} parent=5 // pred_check
      %p141 = pneg %p140
    $region22: #{conv3d_1x1.1} parent=5 // pred_check_branch
      %143 = sbr.rel (%p141) target = $region24
    $region23: #{conv3d_1x1.1} parent=5 // pred_region
      // Predicated region
      $region25: #{conv3d_1x1.1} parent=23 // pred_check
        %p144 = pneg %p43
      $region26: #{conv3d_1x1.1} parent=23 // pred_check_branch
        %146 = sbr.rel (%p144) target = $region28
      $region27: #{conv3d_1x1.1} parent=23 // pred_region
        %s147 = smul.u32 4, %s17
        %p148 = scmp.lt.s32.totalorder %s16, 1
        %s149 = scalar_select %p148, %s16, 1
        %p150 = scmp.lt.s32.totalorder %s147, 3
        %s151 = scalar_select %p150, %s147, 3
        %s152 = smul.addr %s149, 4
        %s153 = sadd.s32 %s151, %s152
        %s154 = smul.addr %s153, 4
        %s155 = scalar_lea.vmem %s0, %s154
        %s156 = smul.u32 4, %s17
      $region28: #{conv3d_1x1.1} parent=23 // pred_fallthru
        _
    $region24: #{conv3d_1x1.1} parent=5 // pred_fallthru
      _
    %p157 = scmp.le.s32.totalorder 1, %s9
    %p158 = scmp.lt.s32.totalorder %s9, 3
    %p159 = pnand %p157, %p158
    %p160 = pneg %p159
    // Predicated region
    $region29: #{conv3d_1x1.1} parent=5 // pred_check
      _
    $region30: #{conv3d_1x1.1} parent=5 // pred_check_branch
      %162 = sbr.rel (%p159) target = $region32
    $region31: #{conv3d_1x1.1} parent=5 // pred_region
      %s163 = ssub.s32 %s9, 1
      %s164 = smul.u32 4, %s19
      %p165 = scmp.lt.s32.totalorder %s18, 1
      %s166 = scalar_select %p165, %s18, 1
      %p167 = scmp.lt.s32.totalorder %s164, 3
      %s168 = scalar_select %p167, %s164, 3
      %s169 = smul.addr %s166, 4
      %s170 = sadd.s32 %s168, %s169
      %s171 = smul.addr %s170, 4
      %s172 = scalar_lea.vmem %s0, %s171
      %p173 = pneg %p49
      %p174 = pneg %p46
      %p175 = pneg %p70
      %p176 = pneg %p67
      %p177 = pneg %p91
      %p178 = pneg %p88
      %p179 = pneg %p119
      %p180 = pneg %p116
      %s181 = smul.u32 4, %s19
      %p182 = scmp.lt.s32.totalorder %s18, 1
      %s183 = scalar_select %p182, %s18, 1
      %p184 = scmp.lt.s32.totalorder %s181, 3
      %s185 = scalar_select %p184, %s181, 3
      %s186 = smul.addr %s183, 4
      %s187 = sadd.s32 %s185, %s186
      %s188 = smul.addr %s187, 8
      %s189 = scalar_lea.vmem %s3, %s188
      %s190 = smul.u32 4, %s19
      %p191 = scmp.lt.s32.totalorder %s18, 1
      %s192 = scalar_select %p191, %s18, 1
      %p193 = scmp.lt.s32.totalorder %s190, 3
      %s194 = scalar_select %p193, %s190, 3
      %s195 = smul.addr %s192, 4
      %s196 = sadd.s32 %s194, %s195
      %s197 = smul.addr %s196, 4
      %s198 = scalar_lea.vmem %s0, %s197
      %s199 = smul.u32 4, %s19
      %s200 = smul.u32 4, %s19
      %p201 = scmp.lt.s32.totalorder %s18, 1
      %s202 = scalar_select %p201, %s18, 1
      %p203 = scmp.lt.s32.totalorder %s200, 3
      %s204 = scalar_select %p203, %s200, 3
      %s205 = smul.addr %s202, 4
      %s206 = sadd.s32 %s204, %s205
      %s207 = smul.addr %s206, 8
      %s208 = scalar_lea.vmem %s3, %s207
      %s209 = smul.u32 4, %s19
      %v210 = vld [vmem:[%s198] sm:$0xff]
      %v211 = vld [vmem:[%s198 + $0x8] sm:$0xff]
      %v212 = vld [vmem:[%s1] sm:$0xff]
      %v213 = vld [vmem:[%s2] sm:$0xff]
      %215 = vset.pattern.permute.xlu0 0
      %216 = vperm.xlu0 %215, %v213
      %v217 = vpop.permute.xlu0 %216
      %220 = vset.pattern.permute.xlu0 0
      %221 = vperm.xlu0 %220, %v212
      %v222 = vpop.permute.xlu0 %221
      %v226 = vlaneseq
      %v227 = vshrl.u32 %v226, 7
      %v228 = vsub.s32 0, %v227
      %v229 = vrot.slane %v210, %v228
      %v230 = vlaneseq
      %v231 = vshrl.u32 %v230, 7
      %v232 = vsub.s32 4, %v231
      %v233 = vrot.slane %v210, %v232
      %v234 = vlaneseq
      %v235 = vshrl.u32 %v234, 7
      %v236 = vsub.s32 0, %v235
      %v237 = vrot.slane %v211, %v236
      %v238 = vlaneseq
      %v239 = vshrl.u32 %v238, 7
      %v240 = vsub.s32 4, %v239
      %v241 = vrot.slane %v211, %v240
      %v246 = vlaneseq
      %v247 = vshrl.u32 %v246, 7
      %v248 = vsub.s32 0, %v247
      %v249 = vrot.slane %v229, %v248
      %v250 = vlaneseq
      %v251 = vshrl.u32 %v250, 7
      %v252 = vsub.s32 0, %v251
      %v253 = vrot.slane %v233, %v252
      %v254 = vlaneseq
      %v255 = vshrl.u32 %v254, 7
      %v256 = vsub.s32 0, %v255
      %v257 = vrot.slane %v237, %v256
      %v258 = vlaneseq
      %v259 = vshrl.u32 %v258, 7
      %v260 = vsub.s32 0, %v259
      %v261 = vrot.slane %v241, %v260
      %v262 = vmul.f32 %v222, %v249
      %v263 = vmul.f32 %v222, %v253
      %v264 = vmul.f32 %v222, %v257
      %v265 = vmul.f32 %v222, %v261
      %v266 = vadd.f32 %v217, %v262
      %v267 = vadd.f32 %v217, %v263
      %v268 = vadd.f32 %v217, %v264
      %v269 = vadd.f32 %v217, %v265
      %270 = vset.pattern.permute.xlu0 1
      %271 = vperm.xlu0 %270, %v212
      %v272 = vpop.permute.xlu0 %271
      %v274 = vlaneseq
      %v275 = vshrl.u32 %v274, 7
      %v276 = vsub.s32 1, %v275
      %v277 = vrot.slane %v210, %v276
      %v278 = vlaneseq
      %v279 = vshrl.u32 %v278, 7
      %v280 = vsub.s32 5, %v279
      %v281 = vrot.slane %v210, %v280
      %v282 = vlaneseq
      %v283 = vshrl.u32 %v282, 7
      %v284 = vsub.s32 1, %v283
      %v285 = vrot.slane %v211, %v284
      %v286 = vlaneseq
      %v287 = vshrl.u32 %v286, 7
      %v288 = vsub.s32 5, %v287
      %v289 = vrot.slane %v211, %v288
      %v294 = vlaneseq
      %v295 = vshrl.u32 %v294, 7
      %v296 = vsub.s32 1, %v295
      %v297 = vrot.slane %v277, %v296
      %v298 = vlaneseq
      %v299 = vshrl.u32 %v298, 7
      %v300 = vsub.s32 1, %v299
      %v301 = vrot.slane %v281, %v300
      %v302 = vlaneseq
      %v303 = vshrl.u32 %v302, 7
      %v304 = vsub.s32 1, %v303
      %v305 = vrot.slane %v285, %v304
      %v306 = vlaneseq
      %v307 = vshrl.u32 %v306, 7
      %v308 = vsub.s32 1, %v307
      %v309 = vrot.slane %v289, %v308
      %v310 = vmul.f32 %v272, %v297
      %v311 = vmul.f32 %v272, %v301
      %v312 = vmul.f32 %v272, %v305
      %v313 = vmul.f32 %v272, %v309
      %v314 = vadd.f32 %v266, %v310
      %v315 = vadd.f32 %v267, %v311
      %v316 = vadd.f32 %v268, %v312
      %v317 = vadd.f32 %v269, %v313
      %318 = vset.pattern.permute.xlu0 2
      %319 = vperm.xlu0 %318, %v212
      %v320 = vpop.permute.xlu0 %319
      %v322 = vlaneseq
      %v323 = vshrl.u32 %v322, 7
      %v324 = vsub.s32 2, %v323
      %v325 = vrot.slane %v210, %v324
      %v326 = vlaneseq
      %v327 = vshrl.u32 %v326, 7
      %v328 = vsub.s32 6, %v327
      %v329 = vrot.slane %v210, %v328
      %v330 = vlaneseq
      %v331 = vshrl.u32 %v330, 7
      %v332 = vsub.s32 2, %v331
      %v333 = vrot.slane %v211, %v332
      %v334 = vlaneseq
      %v335 = vshrl.u32 %v334, 7
      %v336 = vsub.s32 6, %v335
      %v337 = vrot.slane %v211, %v336
      %v342 = vlaneseq
      %v343 = vshrl.u32 %v342, 7
      %v344 = vsub.s32 2, %v343
      %v345 = vrot.slane %v325, %v344
      %v346 = vlaneseq
      %v347 = vshrl.u32 %v346, 7
      %v348 = vsub.s32 2, %v347
      %v349 = vrot.slane %v329, %v348
      %v350 = vlaneseq
      %v351 = vshrl.u32 %v350, 7
      %v352 = vsub.s32 2, %v351
      %v353 = vrot.slane %v333, %v352
      %v354 = vlaneseq
      %v355 = vshrl.u32 %v354, 7
      %v356 = vsub.s32 2, %v355
      %v357 = vrot.slane %v337, %v356
      %v358 = vmul.f32 %v320, %v345
      %v359 = vmul.f32 %v320, %v349
      %v360 = vmul.f32 %v320, %v353
      %v361 = vmul.f32 %v320, %v357
      %v362 = vadd.f32 %v314, %v358
      %v363 = vadd.f32 %v315, %v359
      %v364 = vadd.f32 %v316, %v360
      %v365 = vadd.f32 %v317, %v361
      %366 = vset.pattern.permute.xlu0 3
      %367 = vperm.xlu0 %366, %v212
      %v368 = vpop.permute.xlu0 %367
      %v370 = vlaneseq
      %v371 = vshrl.u32 %v370, 7
      %v372 = vsub.s32 3, %v371
      %v373 = vrot.slane %v210, %v372
      %v374 = vlaneseq
      %v375 = vshrl.u32 %v374, 7
      %v376 = vsub.s32 7, %v375
      %v377 = vrot.slane %v210, %v376
      %v378 = vlaneseq
      %v379 = vshrl.u32 %v378, 7
      %v380 = vsub.s32 3, %v379
      %v381 = vrot.slane %v211, %v380
      %v382 = vlaneseq
      %v383 = vshrl.u32 %v382, 7
      %v384 = vsub.s32 7, %v383
      %v385 = vrot.slane %v211, %v384
      %v390 = vlaneseq
      %v391 = vshrl.u32 %v390, 7
      %v392 = vsub.s32 3, %v391
      %v393 = vrot.slane %v373, %v392
      %v394 = vlaneseq
      %v395 = vshrl.u32 %v394, 7
      %v396 = vsub.s32 3, %v395
      %v397 = vrot.slane %v377, %v396
      %v398 = vlaneseq
      %v399 = vshrl.u32 %v398, 7
      %v400 = vsub.s32 3, %v399
      %v401 = vrot.slane %v381, %v400
      %v402 = vlaneseq
      %v403 = vshrl.u32 %v402, 7
      %v404 = vsub.s32 3, %v403
      %v405 = vrot.slane %v385, %v404
      %v406 = vmul.f32 %v368, %v393
      %v407 = vmul.f32 %v368, %v397
      %v408 = vmul.f32 %v368, %v401
      %v409 = vmul.f32 %v368, %v405
      %v410 = vadd.f32 %v362, %v406
      %v411 = vadd.f32 %v363, %v407
      %v412 = vadd.f32 %v364, %v408
      %v413 = vadd.f32 %v365, %v409
      %414 = vst [vmem:[%s208] sm:$0xff] %v410
      %415 = vst [vmem:[%s208 + $0x8] sm:$0xff] %v411
      %416 = vst [vmem:[%s208 + $0x10] sm:$0xff] %v412
      %417 = vst [vmem:[%s208 + $0x18] sm:$0xff] %v413
      %s418 = smul.u32 4, %s19
      %p419 = scmp.lt.s32.totalorder %s18, 1
      %s420 = scalar_select %p419, %s18, 1
      %p421 = scmp.lt.s32.totalorder %s418, 3
      %s422 = scalar_select %p421, %s418, 3
      %s423 = smul.addr %s420, 4
      %s424 = sadd.s32 %s422, %s423
      %s425 = smul.addr %s424, 8
      %s426 = scalar_lea.vmem %s3, %s425
      // Predicated region
      $region33: #{conv3d_1x1.1} parent=31 // pred_check
        %p427 = pneg %p116
      $region34: #{conv3d_1x1.1} parent=31 // pred_check_branch
        %429 = sbr.rel (%p427) target = $region36
      $region35: #{conv3d_1x1.1} parent=31 // pred_region
        %s430 = smul.u32 4, %s19
      $region36: #{conv3d_1x1.1} parent=31 // pred_fallthru
        _
    $region32: #{conv3d_1x1.1} parent=5 // pred_fallthru
      _
    %p431 = scmp.le.s32.totalorder 2, %s9
    // Predicated region
    $region37: #{conv3d_1x1.1} parent=5 // pred_check
      %p432 = pneg %p431
    $region38: #{conv3d_1x1.1} parent=5 // pred_check_branch
      %434 = sbr.rel (%p432) target = $region40
    $region39: #{conv3d_1x1.1} parent=5 // pred_region
      %s435 = ssub.s32 %s9, 2
      // Predicated region
      $region41: #{conv3d_1x1.1} parent=39 // pred_check
        %p436 = pneg %p122
      $region42: #{conv3d_1x1.1} parent=39 // pred_check_branch
        %438 = sbr.rel (%p436) target = $region44
      $region43: #{conv3d_1x1.1} parent=39 // pred_region
        %s439 = smul.u32 4, %s21
        %p440 = scmp.lt.s32.totalorder %s20, 1
        %s441 = scalar_select %p440, %s20, 1
        %p442 = scmp.lt.s32.totalorder %s439, 3
        %s443 = scalar_select %p442, %s439, 3
        %s444 = smul.addr %s441, 4
        %s445 = sadd.s32 %s443, %s444
        %s446 = smul.addr %s445, 8
        %s447 = scalar_lea.vmem %s3, %s446
      $region44: #{conv3d_1x1.1} parent=39 // pred_fallthru
        _
    $region40: #{conv3d_1x1.1} parent=5 // pred_fallthru
      _
  $region6: #{conv3d_1x1.1} parent=0 // loop_footer
    %s13 = sadd.s32 1, %s9
  $region7: #{conv3d_1x1.1} parent=0 // loop_footer_branch
    %8 = sbr.rel target = $region3
  $region8: #{conv3d_1x1.1} parent=0 // loop_exit
    _

</llo_original>
